<compile_context>
chip_gen: v6e
topology: v6e:2x2x1
jax: 0.10.0
libtpu: 0.0.40
codegen_flags: <defaults>
</compile_context>

<pallas_src>
import numpy as np
import jax
import jax.numpy as jnp
from jax import lax
from jax.experimental import pallas as pl
from jax.experimental.pallas import tpu as pltpu


def to_list(x, n):
    if isinstance(x, (list, tuple)):
        assert len(x) == n
        return list(x)
    return [x] * n


def to_pair(x):
    return tuple(to_list(x, 2))


# ---------------------------------------------------------------------------
# Kernels
# ---------------------------------------------------------------------------
def _make_upsample_kernel(ph, pw):
    """Nearest-neighbour upsample.  Output block view is (B, Hb, ph*pw*W_in)."""

    def kernel_pw(x_ref, m_ref, o_ref):
        b, h, w = x_ref.shape
        w_out = w * pw
        # Fold B into M for one well-filled MXU matmul: (B*Hb, W) @ (W, pw*W).
        x2 = x_ref[...].reshape(b * h, w)
        up = jnp.dot(x2, m_ref[...], preferred_element_type=jnp.float32)
        up3 = up.astype(o_ref.dtype).reshape(b, h, w_out)
        # H replication = ph direct lane-slice stores (no concat intermediate).
        for a in range(ph):
            o_ref[:, :, a * w_out:(a + 1) * w_out] = up3

    def kernel_nopw(x_ref, o_ref):
        b, h, w = x_ref.shape
        x3 = x_ref[...]
        for a in range(ph):
            o_ref[:, :, a * w:(a + 1) * w] = x3

    return kernel_pw if pw > 1 else kernel_nopw


def _make_unpool_kernel(ph, pw, h_blk):
    """MaxUnpool2d directly from the raw flat MaxPool indices (int32).

    rel = idx - ((i*ph)*W_out + j*pw) = dr*W_out + dc  (in-window position),
    built from iotas (no div/mod).  After lane replication, output phase `a`
    at lane o keeps the value iff  rel - (o % pw) == a*W_out.
    """

    def kernel_pw(x_ref, idx_ref, mv_ref, mo_ref, cp_ref, o_ref):
        b, h, w = x_ref.shape
        w_out = w * pw
        i0 = pl.program_id(1) * h_blk            # absolute first row of block
        row = lax.broadcasted_iota(jnp.int32, (b, h, w), 1) + i0
        col = lax.broadcasted_iota(jnp.int32, (b, h, w), 2)
        rel = idx_ref[...] - (row * (ph * w_out) + col * pw)

        x2 = x_ref[...].reshape(b * h, w)
        up_x = jnp.dot(x2, mv_ref[...],
                       preferred_element_type=jnp.float32).astype(o_ref.dtype)
        rel2 = rel.reshape(b * h, w).astype(jnp.float32).astype(mo_ref.dtype)
        q = jnp.dot(rel2, mo_ref[...],
                    preferred_element_type=jnp.float32) - cp_ref[...]
        for a in range(ph):
            seg = jnp.where(q == float(a * w_out), up_x, 0).astype(o_ref.dtype)
            o_ref[:, :, a * w_out:(a + 1) * w_out] = seg.reshape(b, h, w_out)

    def kernel_nopw(x_ref, idx_ref, o_ref):
        b, h, w = x_ref.shape
        i0 = pl.program_id(1) * h_blk
        row = lax.broadcasted_iota(jnp.int32, (b, h, w), 1) + i0
        col = lax.broadcasted_iota(jnp.int32, (b, h, w), 2)
        rel = idx_ref[...] - (row * (ph * w) + col)      # == dr * W
        xv = x_ref[...]
        zero = jnp.zeros((), xv.dtype)
        for a in range(ph):
            o_ref[:, :, a * w:(a + 1) * w] = jnp.where(rel == a * w, xv, zero)

    return kernel_pw if pw > 1 else kernel_nopw


# ---------------------------------------------------------------------------
# Blocking / VMEM heuristics
# ---------------------------------------------------------------------------
def _vmem_capacity_bytes():
    # v7x has 64 MiB / TensorCore, v5e / v6e have 128 MiB; fall back to the
    # smallest (v7x) if the query is unavailable.
    try:
        return int(pltpu.get_tpu_info().vmem_capacity_bytes)
    except Exception:
        return 64 * 1024 * 1024


def _choose_blocks(nc, h, w, ph, pw, itemsize, has_ind, vmem_cap):
    """Pick (planes-per-step B, rows-per-step Hb).

    Budget model per step: double-buffered in/out blocks + single-buffered
    f32 matmul / compare temporaries (the v7x 64 MiB concern).  Prefer >= 4
    total grid steps so both v7x TensorCores get pipeline depth >= 2.
    """
    pack = 8 * max(1, 4 // max(1, itemsize))          # sublane pack: 8 f32, 16 bf16
    frac = 0.16 if vmem_cap <= (64 << 20) else 0.30   # v7x: less VMEM headroom
    budget = max(1 << 20, int(vmem_cap * frac))
    w_up = ph * pw * w

    def cost(b, hb):
        io = hb * w * (itemsize + (4 if has_ind else 0)) + hb * w_up * itemsize
        if pw > 1:
            inter = hb * pw * w * (2 * 4 + 2 * itemsize)   # up_x/q f32 + segs
        else:
            inter = hb * w * (4 + itemsize)
        return b * (2 * io + inter)

    # H blocks: divisors of H that keep the (B,Hb,W)->(B*Hb,W) collapse a free
    # view (multiple of the sublane pack), or the full H.
    h_cands = [d for d in range(1, h + 1)
               if h % d == 0 and (d % pack == 0 or d == h)]
    fit_h = [d for d in h_cands if cost(1, d) <= budget]
    hb = max(fit_h) if fit_h else min(h_cands)

    b_cands = [d for d in range(1, nc + 1)
               if nc % d == 0 and cost(d, hb) <= budget] or [1]
    pref = [d for d in b_cands if (nc // d) * (h // hb) >= 4]
    b = max(pref) if pref else max(b_cands)
    if (nc // b) * (h // hb) < 4:
        smaller = [d for d in h_cands if d <= hb and (nc // b) * (h // d) >= 4]
        if smaller:
            hb = max(smaller)
    return b, hb


# ---------------------------------------------------------------------------
# Wrapper (the Unpool2d module forward)
# ---------------------------------------------------------------------------
class Unpool2d:
    """2d MaxUnpooling if indices are provided else (nearest) upsampling."""

    def __init__(self, pool_size):
        self.pool_size = to_pair(pool_size)

    def __call__(self, x, seq_len=None, indices=None):
        if all(np.array(self.pool_size) < 2):
            return x, seq_len

        ph, pw = self.pool_size
        n, c, h_in, w_in = x.shape
        h_out, w_out = h_in * ph, w_in * pw
        nc = n * c
        itemsize = x.dtype.itemsize
        has_ind = indices is not None

        # -- blocking / VMEM budget ------------------------------------------
        # x is viewed as (NC, H_in, W_in); the kernel writes the output in the
        # (NC, H_in, ph*pw*W_in) view, which reshapes for free (row-major) to
        # (N, C, H_out, W_out).  Note: when ph*pw*W_in < 128 the output stores
        # are lane-masked; the kernel only reaches full store bandwidth once
        # the output row is a multiple of 128 lanes.
        vmem_cap = _vmem_capacity_bytes()
        vmem_limit = max(32 * 1024 * 1024,
                         min(int(vmem_cap * 0.70), 100 * 1024 * 1024))
        b, hb = _choose_blocks(nc, h_in, w_in, ph, pw, itemsize, has_ind,
                               vmem_cap)
        grid = (nc // b, h_in // hb)

        x3 = x.reshape(nc, h_in, w_in)
        blk_plane = pl.BlockSpec((b, hb, w_in), lambda i, j: (i, j, 0))
        blk_out = pl.BlockSpec((b, hb, ph * pw * w_in), lambda i, j: (i, j, 0))
        out_struct = jax.ShapeDtypeStruct((nc, h_in, ph * pw * w_in), x.dtype)
        cparams = pltpu.CompilerParams(
            dimension_semantics=("parallel", "parallel"),
            vmem_limit_bytes=int(vmem_limit),
        )

        # Tiny constant operands (W-replication matrix, column pattern): fed
        # with a constant index_map so they are DMA'd into VMEM once and never
        # rebuilt on the VPU inside the grid loop (megacore-safe).
        const_ops, const_specs = [], []
        if pw > 1:
            jj = np.arange(w_in)[:, None]
            oo = np.arange(w_out)[None, :]
            repl = (oo // pw) == jj                      # (W_in, W_out) 0/1
            mask_val = jnp.asarray(repl, dtype=x.dtype)
            const_ops.append(mask_val)
            const_specs.append(pl.BlockSpec((w_in, w_out), lambda i, j: (0, 0)))

        if not has_ind:
            cost = pl.CostEstimate(
                flops=(2 * nc * h_in * w_in * w_out) if pw > 1 else 0,
                transcendentals=0,
                bytes_accessed=nc * h_in * w_in * itemsize
                + nc * h_out * w_out * itemsize,
            )
            out = pl.pallas_call(
                _make_upsample_kernel(ph, pw),
                out_shape=out_struct,
                grid_spec=pltpu.PrefetchScalarGridSpec(
                    num_scalar_prefetch=0,
                    grid=grid,
                    in_specs=[blk_plane] + const_specs,
                    out_specs=blk_out,
                ),
                compiler_params=cparams,
                cost_estimate=cost,
            )(x3, *const_ops)
        else:
            # PyTorch MaxUnpool2d indices are flat positions into the
            # (H_out*W_out) plane.  With stride == kernel_size pooling they
            # always fall inside the matching (ph, pw) window, so the kernel
            # only needs the in-window offset, rebuilt from iotas in-kernel
            # (no extra XLA pre-pass over the indices array).
            # TODO(synk): arbitrary out-of-window MaxUnpool2d indices are
            # zeroed rather than scattered to their true position.
            idx3 = indices.reshape(nc, h_in, w_in).astype(jnp.int32)
            max_rel = (ph - 1) * w_out + (pw - 1)
            assert max_rel < (1 << 24)    # f32-exact replication of offsets
            if pw > 1:
                off_dtype = jnp.bfloat16 if max_rel <= 256 else jnp.float32
                mask_off = jnp.asarray(repl, dtype=off_dtype)
                cpat = jnp.asarray(oo % pw, dtype=np.float32)   # (1, W_out)
                const_ops += [mask_off, cpat]
                const_specs += [
                    pl.BlockSpec((w_in, w_out), lambda i, j: (0, 0)),
                    pl.BlockSpec((1, w_out), lambda i, j: (0, 0)),
                ]
            cost = pl.CostEstimate(
                flops=(4 * nc * h_in * w_in * w_out) if pw > 1 else 0,
                transcendentals=0,
                bytes_accessed=nc * h_in * w_in * (itemsize + 4)
                + nc * h_out * w_out * itemsize,
            )
            out = pl.pallas_call(
                _make_unpool_kernel(ph, pw, hb),
                out_shape=out_struct,
                grid_spec=pltpu.PrefetchScalarGridSpec(
                    num_scalar_prefetch=0,
                    grid=grid,
                    in_specs=[blk_plane, blk_plane] + const_specs,
                    out_specs=blk_out,
                ),
                compiler_params=cparams,
                cost_estimate=cost,
            )(x3, idx3, *const_ops)

        out = out.reshape(n, c, h_out, w_out)

        if seq_len is not None:
            # Matches the upstream module: seq_len *= pool[-1]; np.maximum(..).
            seq_len = np.asarray(seq_len) * self.pool_size[-1]
            seq_len = np.maximum(seq_len, out.shape[-1])
        return out, seq_len


# ---------------------------------------------------------------------------
# Test / demo
# ---------------------------------------------------------------------------
def _ref_upsample(x, ph, pw):
    return jnp.repeat(jnp.repeat(x, ph, axis=2), pw, axis=3)


def _ref_unpool(x, indices, ph, pw):
    n, c, h, w = x.shape
    ref = np.zeros((n, c, h * ph, w * pw), dtype=np.float32)
    xn = np.asarray(x, dtype=np.float32)
    indn = np.asarray(indices)
    for n_ in range(n):
        for c_ in range(c):
            flat = indn[n_, c_].reshape(-1)
            ref[n_, c_].reshape(-1)[flat] = xn[n_, c_].reshape(-1)
    return ref


def _make_indices(n, c, h, w, ph, pw):
    # Valid MaxPool2d-style indices: a deterministic in-window position per
    # input pixel, flattened over the (H_out, W_out) plane (PyTorch convention).
    w_out = w * pw
    ii, jj = np.meshgrid(np.arange(h), np.arange(w), indexing="ij")
    a = (ii + jj) % ph
    b = (ii * 3 + jj) % pw
    plane = (ii * ph + a) * w_out + (jj * pw + b)
    return jnp.asarray(np.broadcast_to(plane, (n, c, h, w)).astype(np.int32))


if __name__ == "__main__":
    k1, k2 = jax.random.split(jax.random.PRNGKey(0))
    N, C, H, W = 2, 4, 16, 32          # W=32 -> 128-lane-dense output rows (2x2)
    pool_size = (2, 2)
    ph, pw = pool_size

    x = jax.random.normal(k1, (N, C, H, W), dtype=jnp.float32)
    seq_len = np.array([30, 24], dtype=np.int64)
    unpool = Unpool2d(pool_size)

    # ---- Path 1: indices=None -> nearest-neighbour upsample -----------------
    out_up, seq_out = unpool(x, seq_len=seq_len, indices=None)
    out_up = jax.block_until_ready(out_up)
    assert out_up.shape == (N, C, H * ph, W * pw)
    assert out_up.dtype == x.dtype
    np.testing.assert_allclose(np.asarray(out_up),
                               np.asarray(_ref_upsample(x, ph, pw)),
                               rtol=1e-6, atol=1e-6)
    assert np.array_equal(seq_out, np.maximum(seq_len * pw, out_up.shape[-1]))

    # ---- Path 2: indices provided -> MaxUnpool2d -----------------------------
    indices = _make_indices(N, C, H, W, ph, pw)
    out_unpool, _ = unpool(x, seq_len=None, indices=indices)
    out_unpool = jax.block_until_ready(out_unpool)
    np.testing.assert_allclose(np.asarray(out_unpool),
                               _ref_unpool(x, indices, ph, pw),
                               rtol=1e-6, atol=1e-6)

    # ---- Path 3: pool_size < 2 -> identity -----------------------------------
    ident = Unpool2d(1)
    out_id, seq_id = ident(x, seq_len=seq_len)
    assert out_id is x and seq_id is seq_len

    # ---- Path 4: non-square pool (2, 3), both code paths ----------------------
    unpool23 = Unpool2d((2, 3))
    x2 = jax.random.normal(k2, (1, 2, 8, 16), dtype=jnp.float32)
    up23, _ = unpool23(x2, seq_len=None, indices=None)
    up23 = jax.block_until_ready(up23)
    np.testing.assert_allclose(np.asarray(up23),
                               np.asarray(_ref_upsample(x2, 2, 3)),
                               rtol=1e-6, atol=1e-6)
    ind23 = _make_indices(1, 2, 8, 16, 2, 3)
    un23, _ = unpool23(x2, seq_len=None, indices=ind23)
    un23 = jax.block_until_ready(un23)
    np.testing.assert_allclose(np.asarray(un23),
                               _ref_unpool(x2, ind23, 2, 3),
                               rtol=1e-6, atol=1e-6)

    # ---- Path 5: pool (2, 1) -> exercises the pw == 1 (no-matmul) kernels ----
    unpool21 = Unpool2d((2, 1))
    up21, _ = unpool21(x, seq_len=None, indices=None)
    up21 = jax.block_until_ready(up21)
    np.testing.assert_allclose(np.asarray(up21),
                               np.asarray(_ref_upsample(x, 2, 1)),
                               rtol=1e-6, atol=1e-6)
    ind21 = _make_indices(N, C, H, W, 2, 1)
    un21, _ = unpool21(x, seq_len=None, indices=ind21)
    un21 = jax.block_until_ready(un21)
    np.testing.assert_allclose(np.asarray(un21),
                               _ref_unpool(x, ind21, 2, 1),
                               rtol=1e-6, atol=1e-6)

    # ---- Path 6: bf16, exact through the bf16 MXU paths -----------------------
    xb = x.astype(jnp.bfloat16)
    up_b, _ = unpool(xb, seq_len=None, indices=None)
    up_b = jax.block_until_ready(up_b)
    np.testing.assert_array_equal(
        np.asarray(up_b.astype(jnp.float32)),
        np.asarray(_ref_upsample(xb, ph, pw).astype(jnp.float32)))
    un_b, _ = unpool(xb, seq_len=None, indices=indices)
    un_b = jax.block_until_ready(un_b)
    np.testing.assert_array_equal(
        np.asarray(un_b.astype(jnp.float32)),
        _ref_unpool(xb, indices, ph, pw))

    print("KERNEL_OK")
</pallas_src>

<mosaic_0001>
module attributes {stable_mosaic.version = 11 : i64} {
  func.func @kernel_pw(%arg0: i32, %arg1: i32, %arg2: memref<2x16x32xf32, #tpu.memory_space<vmem>>, %arg3: memref<32x64xf32, #tpu.memory_space<vmem>>, %arg4: memref<2x16x128xf32, #tpu.memory_space<vmem>>) attributes {dimension_semantics = [#tpu.dimension_semantics<parallel>, #tpu.dimension_semantics<parallel>], iteration_bounds = array<i64: 4, 1>, scalar_prefetch = 0 : i64, scratch_operands = 0 : i64, tpu.core_type = #tpu.core_type<tc>, window_params = [{transform_indices = @transform_0, window_bounds = array<i64: 2, 16, 32>}, {pipeline_mode = #tpu.pipeline_mode<synchronous>, transform_indices = @transform_1, window_bounds = array<i64: 32, 64>}, {transform_indices = @transform_2, window_bounds = array<i64: 2, 16, 128>}]} {
    %c0 = arith.constant 0 : index
    %c0_0 = arith.constant 0 : index
    %c0_1 = arith.constant 0 : index
    %0 = vector.load %arg2[%c0, %c0_0, %c0_1] : memref<2x16x32xf32, #tpu.memory_space<vmem>>, vector<2x16x32xf32>
    %1 = vector.shape_cast %0 : vector<2x16x32xf32> to vector<32x32xf32>
    %c0_2 = arith.constant 0 : index
    %c0_3 = arith.constant 0 : index
    %2 = vector.load %arg3[%c0_2, %c0_3] : memref<32x64xf32, #tpu.memory_space<vmem>>, vector<32x64xf32>
    %cst = arith.constant dense<0.000000e+00> : vector<32x64xf32>
    %3 = tpu.matmul %1, %2, %cst {dimension_numbers = #tpu.dot_dimension_numbers<[1], [0], [0], [1], [0, 0, 1, 1], [], []>} : vector<32x32xf32>, vector<32x64xf32>, vector<32x64xf32> -> vector<32x64xf32>
    %4 = vector.shape_cast %3 : vector<32x64xf32> to vector<2x16x64xf32>
    %c0_4 = arith.constant 0 : index
    %c0_5 = arith.constant 0 : index
    %c0_6 = arith.constant 0 : index
    %5 = vector.load %arg4[%c0_4, %c0_5, %c0_6] : memref<2x16x128xf32, #tpu.memory_space<vmem>>, vector<2x16x64xf32>
    tpu.vector_store %arg4[%c0_4, %c0_5, %c0_6], %4 {strides = array<i32>} : memref<2x16x128xf32, #tpu.memory_space<vmem>>, vector<2x16x64xf32>,
    %c0_7 = arith.constant 0 : index
    %c0_8 = arith.constant 0 : index
    %c64 = arith.constant 64 : index
    %6 = vector.load %arg4[%c0_7, %c0_8, %c64] : memref<2x16x128xf32, #tpu.memory_space<vmem>>, vector<2x16x64xf32>
    tpu.vector_store %arg4[%c0_7, %c0_8, %c64], %4 {strides = array<i32>} : memref<2x16x128xf32, #tpu.memory_space<vmem>>, vector<2x16x64xf32>,
    return
  }
  func.func @transform_0(%arg0: i32, %arg1: i32) -> (i32, i32, i32) {
    %c0_i32 = arith.constant 0 : i32
    %c0_i32_0 = arith.constant 0 : i32
    return %arg0, %arg1, %c0_i32 : i32, i32, i32
  }
  func.func @transform_1(%arg0: i32, %arg1: i32) -> (i32, i32) {
    %c0_i32 = arith.constant 0 : i32
    %c0_i32_0 = arith.constant 0 : i32
    %c0_i32_1 = arith.constant 0 : i32
    return %c0_i32, %c0_i32_0 : i32, i32
  }
  func.func @transform_2(%arg0: i32, %arg1: i32) -> (i32, i32, i32) {
    %c0_i32 = arith.constant 0 : i32
    %c0_i32_0 = arith.constant 0 : i32
    return %arg0, %arg1, %c0_i32 : i32, i32, i32
  }
}

</mosaic_0001>

<llo_original>
// kernel: tpu_custom_call.1
$region0: #{tpu_custom_call.1}
  #allocation0 [shape = 'u32[]', space=smem, size = 0x4, offset = 0x4, fixed_abs, tag = 'smem constant byte address 0x4 - core index']
  #allocation1 [shape = 'u32[144,128]{1,0:T(1,128)}', space=vmem, size = 0x12000, scoped, tag = 'internal scratch']
  %s0 = inlined_call_operand.hbm [shape: f32[8,16,32], index: 0, kind: input, shape index: {}]
  %s1 = inlined_call_operand.hbm [shape: f32[32,64], index: 1, kind: input, shape index: {}]
  %s2 = inlined_call_operand.hbm [shape: f32[8,16,128], index: 2, kind: output, shape index: {}]
  %s3 = sld [smem:[#allocation0]]
  $region49: #{tpu_custom_call.1} parent=0
    _
  %s5 = ssub.s32 1, %s3
  %s6 = scalar_select 0, %s5, %s3
  $region1: #{tpu_custom_call.1} parent=0
    #allocation2 [shape = 'u8[32768]{0}', space=vmem, size = 0x8000, scoped, tag = 'input window, operand 0']
    #allocation3 [shape = 's32[2]{0}', space=sflag, size = 0x8, scoped, tag = 'scoped memory for tpu_custom_call.1']
    #allocation4 [shape = 's32[2]{0}', space=sflag, size = 0x8, scoped, tag = 'scoped memory for tpu_custom_call.1']
    #allocation5 [shape = 'u8[16384]{0}', space=vmem, size = 0x4000, scoped, tag = 'input window, operand 1, single buffered']
    #allocation6 [shape = 's32[1]{0}', space=sflag, size = 0x4, scoped, tag = 'scoped memory for tpu_custom_call.1']
    #allocation7 [shape = 'u8[32768]{0}', space=vmem, size = 0x8000, scoped, tag = 'output window, operand 0']
    %7 = vsyncpa [#allocation3], 0
    %s8 = scalar_lea.sflag [#allocation3], 1
    %9 = vsyncpa %s8, 0
    %10 = vsyncpa [#allocation6], 0
    %11 = vsyncpa [#allocation4], 0
    %s12 = scalar_lea.sflag [#allocation4], 1
    %13 = vsyncpa %s12, 0
    loop: start=0, step=1, limit=6
    $region2: #{tpu_custom_call.1} parent=1 // loop_pre_header
      _
    $region3: #{tpu_custom_call.1} parent=1 // loop_header
      %s15 = sphi 0, %s19
      %p16 = scmp.ge.s32.totalorder %s15, 6
      %s22 = sphi 0, %s34
      %s23 = sphi 0, %s30
      %s24 = sphi 0, %s22
      %s25 = sphi 0, %s23
      %s26 = sphi 0, %s24
      %s27 = sphi 0, %s25
      %s39 = sphi 0, %s41
      %s42 = sphi 0, %s39
      %s43 = sphi 0, %s42
      %s59 = sphi 0, %s43
      %s63 = sphi 0, %s63
      %s65 = sphi 0, %s63
      %s66 = sphi 0, %s65
      %s80 = sphi 0, %s66
      %s88 = sphi 0, %s90
      %s91 = sphi 0, %s88
      %s92 = sphi 0, %s91
      %s108 = sphi 0, %s92
    $region4: #{tpu_custom_call.1} parent=1 // loop_header_branch
      %18 = sbr.rel (%p16) target = $region8
    $region5: #{tpu_custom_call.1} parent=1 // loop_body
      %s20 = ssub.s32 %s15, 1
      %s21 = ssub.s32 %s15, 2
      %s28 = sadd.s32 1, %s23
      %p29 = scmp.ge.s32.totalorder %s28, 1
      %s30 = scalar_select %p29, 0, %s28
      %s31 = sadd.s32 1, %s22
      %s32 = scalar_select %p29, %s31, %s22
      %p33 = scmp.ge.s32.totalorder %s32, 4
      %s34 = scalar_select %p33, 0, %s32
      %s35 = ssub.s32 %s22, %s34
      %s36 = ssub.s32 %s23, %s30
      %s37 = sor.u32 %s35, %s36
      %p38 = scmp.eq.s32.totalorder %s37, 0
      %s40 = sadd.s32 %s39, 1
      %s41 = scalar_select %p38, %s39, %s40
      %p44 = pneg %p38
      %p45 = scmp.eq.s32.totalorder %s15, 3
      %p46 = por %p44, %p45
      %p47 = scmp.ne.s32.totalorder %s39, %s42
      %p48 = scmp.eq.s32.totalorder %s15, 0
      %p49 = por %p47, %p48
      %p50 = scmp.ne.s32.totalorder %s39, %s42
      %p51 = scmp.eq.s32.totalorder %s20, 3
      %p52 = por %p50, %p51
      %p53 = scmp.ne.s32.totalorder %s42, %s43
      %p54 = scmp.eq.s32.totalorder %s20, 0
      %p55 = por %p53, %p54
      %p56 = scmp.ne.s32.totalorder %s42, %s43
      %p57 = scmp.eq.s32.totalorder %s21, 3
      %p58 = por %p56, %p57
      %p60 = scmp.ne.s32.totalorder %s43, %s59
      %p61 = scmp.eq.s32.totalorder %s21, 0
      %p62 = por %p60, %p61
      %s64 = sadd.s32 %s63, 1
      %p67 = scmp.eq.s32.totalorder %s15, 3
      %p68 = scmp.ne.s32.totalorder %s63, %s65
      %p69 = scmp.eq.s32.totalorder %s15, 0
      %p70 = por %p68, %p69
      %p71 = scmp.ne.s32.totalorder %s63, %s65
      %p72 = scmp.eq.s32.totalorder %s20, 3
      %p73 = por %p71, %p72
      %p74 = scmp.ne.s32.totalorder %s65, %s66
      %p75 = scmp.eq.s32.totalorder %s20, 0
      %p76 = por %p74, %p75
      %p77 = scmp.ne.s32.totalorder %s65, %s66
      %p78 = scmp.eq.s32.totalorder %s21, 3
      %p79 = por %p77, %p78
      %p81 = scmp.ne.s32.totalorder %s66, %s80
      %p82 = scmp.eq.s32.totalorder %s21, 0
      %p83 = por %p81, %p82
      %s84 = ssub.s32 %s22, %s34
      %s85 = ssub.s32 %s23, %s30
      %s86 = sor.u32 %s84, %s85
      %p87 = scmp.eq.s32.totalorder %s86, 0
      %s89 = sadd.s32 %s88, 1
      %s90 = scalar_select %p87, %s88, %s89
      %p93 = pneg %p87
      %p94 = scmp.eq.s32.totalorder %s15, 3
      %p95 = por %p93, %p94
      %p96 = scmp.ne.s32.totalorder %s88, %s91
      %p97 = scmp.eq.s32.totalorder %s15, 0
      %p98 = por %p96, %p97
      %p99 = scmp.ne.s32.totalorder %s88, %s91
      %p100 = scmp.eq.s32.totalorder %s20, 3
      %p101 = por %p99, %p100
      %p102 = scmp.ne.s32.totalorder %s91, %s92
      %p103 = scmp.eq.s32.totalorder %s20, 0
      %p104 = por %p102, %p103
      %p105 = scmp.ne.s32.totalorder %s91, %s92
      %p106 = scmp.eq.s32.totalorder %s21, 3
      %p107 = por %p105, %p106
      %p109 = scmp.ne.s32.totalorder %s92, %s108
      %p110 = scmp.eq.s32.totalorder %s21, 0
      %p111 = por %p109, %p110
      %p112 = scmp.le.s32.totalorder 1, %s15
      %p113 = scmp.lt.s32.totalorder %s15, 5
      %p114 = pnand %p112, %p113
      %p115 = pneg %p114
      // Predicated region
      $region9: #{tpu_custom_call.1} parent=5 // pred_check
        _
      $region10: #{tpu_custom_call.1} parent=5 // pred_check_branch
        %117 = sbr.rel (%p114) target = $region12
      $region11: #{tpu_custom_call.1} parent=5 // pred_region
        %s118 = ssub.s32 %s15, 1
        // Predicated region
        $region13: #{tpu_custom_call.1} parent=11 // pred_check
          %p119 = pneg %p76
        $region14: #{tpu_custom_call.1} parent=11 // pred_check_branch
          %121 = sbr.rel (%p119) target = $region16
        $region15: #{tpu_custom_call.1} parent=11 // pred_region
          %s123 = ssub.s32 512, 512
          %124 = vsyncadd [#allocation6], %s123
          %s125 = sshll.u32 [#allocation5], 4
          %s126 = int_to_ptr.vmem [resolvable:$true] %s125
          %131 = dma.hbm_to_vmem [thread:$0]  %s1, 512, %s126, [#allocation6], 128, 128, 8
        $region16: #{tpu_custom_call.1} parent=11 // pred_fallthru
          _
      $region12: #{tpu_custom_call.1} parent=5 // pred_fallthru
        _
      %p132 = scmp.lt.s32.totalorder %s15, 4
      // Predicated region
      $region17: #{tpu_custom_call.1} parent=5 // pred_check
        %p133 = pneg %p132
      $region18: #{tpu_custom_call.1} parent=5 // pred_check_branch
        %135 = sbr.rel (%p133) target = $region20
      $region19: #{tpu_custom_call.1} parent=5 // pred_region
        // Predicated region
        $region21: #{tpu_custom_call.1} parent=19 // pred_check
          %p136 = pneg %p49
        $region22: #{tpu_custom_call.1} parent=19 // pred_check_branch
          %138 = sbr.rel (%p136) target = $region24
        $region23: #{tpu_custom_call.1} parent=19 // pred_region
          %s139 = sand.u32 %s39, 1
          %s140 = scalar_lea.sflag [#allocation3], %s139
          %s141 = sand.u32 %s39, 1
          %s142 = smul.addr %s141, 32
          %s143 = scalar_lea.vmem [#allocation2], %s142
          %s144 = smul.u32 2, %s22
          %s145 = smul.u32 2, %s23
          %s147 = ssub.s32 512, 512
          %148 = vsyncadd %s140, %s147
          %s149 = smul.addr %s144, 2
          %s150 = sadd.s32 %s145, %s149
          %s151 = smul.addr %s150, 128
          %s152 = scalar_lea.hbm %s0, %s151
          %s153 = sshll.u32 %s143, 4
          %s154 = int_to_ptr.vmem [resolvable:$true] %s153
          %159 = dma.hbm_to_vmem [thread:$0]  %s152, 512, %s154, %s140, 128, 128, 8
        $region24: #{tpu_custom_call.1} parent=19 // pred_fallthru
          _
      $region20: #{tpu_custom_call.1} parent=5 // pred_fallthru
        _
      %p160 = scmp.le.s32.totalorder 1, %s15
      %p161 = scmp.lt.s32.totalorder %s15, 5
      %p162 = pnand %p160, %p161
      %p163 = pneg %p162
      // Predicated region
      $region25: #{tpu_custom_call.1} parent=5 // pred_check
        _
      $region26: #{tpu_custom_call.1} parent=5 // pred_check_branch
        %165 = sbr.rel (%p162) target = $region28
      $region27: #{tpu_custom_call.1} parent=5 // pred_region
        %s166 = ssub.s32 %s15, 1
        %s167 = sand.u32 %s42, 1
        %s168 = scalar_lea.sflag [#allocation3], %s167
        %s169 = sand.u32 %s42, 1
        %s170 = smul.addr %s169, 32
        %s171 = scalar_lea.vmem [#allocation2], %s170
        // Predicated region
        $region29: #{tpu_custom_call.1} parent=27 // pred_check
          %p172 = pneg %p55
        $region30: #{tpu_custom_call.1} parent=27 // pred_check_branch
          %174 = sbr.rel (%p172) target = $region32
        $region31: #{tpu_custom_call.1} parent=27 // pred_region
          %175 = dma.done %s168, 512
        $region32: #{tpu_custom_call.1} parent=27 // pred_fallthru
          _
        // Predicated region
        $region33: #{tpu_custom_call.1} parent=27 // pred_check
          %p176 = pneg %p76
        $region34: #{tpu_custom_call.1} parent=27 // pred_check_branch
          %178 = sbr.rel (%p176) target = $region36
        $region35: #{tpu_custom_call.1} parent=27 // pred_region
          %179 = dma.done [#allocation6], 512
        $region36: #{tpu_custom_call.1} parent=27 // pred_fallthru
          _
        %s180 = sand.u32 %s42, 1
        %s181 = scalar_lea.sflag [#allocation3], %s180
        %s182 = sand.u32 %s42, 1
        %s183 = smul.addr %s182, 32
        %s184 = scalar_lea.vmem [#allocation2], %s183
        %p185 = pneg %p55
        %p186 = pneg %p52
        %p187 = pneg %p76
        %p188 = pneg %p73
        %p189 = pneg %p104
        %p190 = pneg %p101
        %s191 = sand.u32 %s91, 1
        %s192 = scalar_lea.sflag [#allocation4], %s191
        %s193 = sand.u32 %s91, 1
        %s194 = smul.addr %s193, 32
        %s195 = scalar_lea.vmem [#allocation7], %s194
        %s196 = smul.u32 2, %s24
        %s197 = smul.u32 2, %s25
        %s198 = smul.u32 2, %s24
        %s199 = smul.u32 2, %s25
        %v200 = vld [vmem:[%s171] sm:$0xff]
        %v201 = vld [vmem:[%s171 + $0x8] sm:$0xff]
        %v202 = vld [vmem:[%s171 + $0x10] sm:$0xff]
        %v203 = vld [vmem:[%s171 + $0x18] sm:$0xff]
        %v204 = vld [vmem:[#allocation5] sm:$0xff]
        %v205 = vld [vmem:[#allocation5 + $0x8] sm:$0xff]
        %v206 = vld [vmem:[#allocation5 + $0x10] sm:$0xff]
        %v207 = vld [vmem:[#allocation5 + $0x18] sm:$0xff]
        %vm208 = vcmask 261120
        %v210 = vsel %vm208, %v200, 0
        %v213 = vsel %vm208, %v201, 0
        %v216 = vsel %vm208, %v202, 0
        %v219 = vsel %vm208, %v203, 0
        %221 = vmatprep.subr.mxu0 0.0
        %222 = vmatpush1.msra.mxu0 0.0
        %223 = vmatprep.subr.mxu0 0.0
        %224 = vmatpush1.msra.mxu0 0.0
        %225 = vmatprep.subr.mxu0 0.0
        %226 = vmatpush1.msra.mxu0 0.0
        %227 = vmatprep.subr.mxu0 0.0
        %228 = vmatpush1.msra.mxu0 0.0
        %229 = vmatprep.subr.mxu0 0.0
        %230 = vmatpush1.msra.mxu0 0.0
        %231 = vmatprep.subr.mxu0 0.0
        %232 = vmatpush1.msra.mxu0 0.0
        %233 = vmatprep.subr.mxu0 0.0
        %234 = vmatpush1.msra.mxu0 0.0
        %235 = vmatprep.subr.mxu0 0.0
        %236 = vmatpush1.msra.mxu0 0.0
        %237 = vmatprep.subr.mxu0 0.0
        %238 = vmatpush1.msra.mxu0 0.0
        %239 = vmatprep.subr.mxu0 0.0
        %240 = vmatpush1.msra.mxu0 0.0
        %241 = vmatprep.subr.mxu0 0.0
        %242 = vmatpush1.msra.mxu0 0.0
        %243 = vmatprep.subr.mxu0 0.0
        %244 = vmatpush1.msra.mxu0 0.0
        %245 = vmatprep.subr.mxu0 0.0
        %246 = vmatpush1.msra.mxu0 %v207
        %247 = vmatprep.subr.mxu0 0.0
        %248 = vmatpush1.msra.mxu0 %v206
        %249 = vmatprep.subr.mxu0 0.0
        %250 = vmatpush1.msra.mxu0 %v205
        %251 = vmatprep.subr.mxu0 0.0
        %252 = vmatpush1.msra.mxu0 %v204
        %253 = vmatprep.subr.mxu0 0.0
        %254 = vmatpush2.msra.mxu0 0.0
        %255 = vmatprep.subr.mxu0 0.0
        %256 = vmatpush2.msra.mxu0 0.0
        %257 = vmatprep.subr.mxu0 0.0
        %258 = vmatpush2.msra.mxu0 0.0
        %259 = vmatprep.subr.mxu0 0.0
        %260 = vmatpush2.msra.mxu0 0.0
        %261 = vmatprep.subr.mxu0 0.0
        %262 = vmatpush2.msra.mxu0 0.0
        %263 = vmatprep.subr.mxu0 0.0
        %264 = vmatpush2.msra.mxu0 0.0
        %265 = vmatprep.subr.mxu0 0.0
        %266 = vmatpush2.msra.mxu0 0.0
        %267 = vmatprep.subr.mxu0 0.0
        %268 = vmatpush2.msra.mxu0 0.0
        %269 = vmatprep.subr.mxu0 0.0
        %270 = vmatpush2.msra.mxu0 0.0
        %271 = vmatprep.subr.mxu0 0.0
        %272 = vmatpush2.msra.mxu0 0.0
        %273 = vmatprep.subr.mxu0 0.0
        %274 = vmatpush2.msra.mxu0 0.0
        %275 = vmatprep.subr.mxu0 0.0
        %276 = vmatpush2.msra.mxu0 0.0
        %277 = vmatprep.subr.mxu0 0.0
        %278 = vmatpush2.msra.mxu0 0.0
        %279 = vmatprep.subr.mxu0 0.0
        %280 = vmatpush2.msra.mxu0 0.0
        %281 = vmatprep.subr.mxu0 0.0
        %282 = vmatpush2.msra.mxu0 0.0
        %283 = vmatprep.subr.mxu0 0.0
        %284 = vmatpush2.msra.mxu0 0.0
        %285 = vmatprep.mubr.f32.mxu0 0.0
        %286 = vmatmul.mubr.f32.gmra.mxu0 %v210
        %v287 = vpop.f32.mrf.mxu0
        %v288 = vadd.f32 0.0, %v287
        %v289 = vpop.f32.mrf.mxu0
        %290 = vmatprep.mubr.f32.mxu0 0.0
        %291 = vmatmul.mubr.f32.gmra.mxu0 %v213
        %v292 = vpop.f32.mrf.mxu0
        %v293 = vadd.f32 0.0, %v292
        %v294 = vpop.f32.mrf.mxu0
        %295 = vmatprep.mubr.f32.mxu0 0.0
        %296 = vmatmul.mubr.f32.gmra.mxu0 %v216
        %v297 = vpop.f32.mrf.mxu0
        %v298 = vadd.f32 0.0, %v297
        %v299 = vpop.f32.mrf.mxu0
        %300 = vmatprep.mubr.f32.mxu0 0.0
        %301 = vmatmul.mubr.f32.gmra.mxu0 %v219
        %v302 = vpop.f32.mrf.mxu0
        %v303 = vadd.f32 0.0, %v302
        %v304 = vpop.f32.mrf.mxu0
        %305 = vdwg.mxu0
        %vm306 = vcmask 523264
        %307 = vst.msk [vmem:[%s195] sm:$0xff] %vm306, %v288
        %308 = vst.msk [vmem:[%s195 + $0x8] sm:$0xff] %vm306, %v293
        %309 = vst.msk [vmem:[%s195 + $0x10] sm:$0xff] %vm306, %v298
        %310 = vst.msk [vmem:[%s195 + $0x18] sm:$0xff] %vm306, %v303
        %315 = vrot.lane.b32.xlu0 %v288, 64
        %v316 = vpop.permute.xlu0 %315
        %317 = vrot.lane.b32.xlu0 %v293, 64
        %v318 = vpop.permute.xlu0 %317
        %319 = vrot.lane.b32.xlu0 %v298, 64
        %v320 = vpop.permute.xlu0 %319
        %321 = vrot.lane.b32.xlu0 %v303, 64
        %v322 = vpop.permute.xlu0 %321
        %vm327 = vcmask 1048064
        %328 = vst.msk [vmem:[%s195] sm:$0xff] %vm327, %v316
        %329 = vst.msk [vmem:[%s195 + $0x8] sm:$0xff] %vm327, %v318
        %330 = vst.msk [vmem:[%s195 + $0x10] sm:$0xff] %vm327, %v320
        %331 = vst.msk [vmem:[%s195 + $0x18] sm:$0xff] %vm327, %v322
        %s332 = sand.u32 %s91, 1
        %s333 = scalar_lea.sflag [#allocation4], %s332
        %s334 = sand.u32 %s91, 1
        %s335 = smul.addr %s334, 32
        %s336 = scalar_lea.vmem [#allocation7], %s335
        // Predicated region
        $region37: #{tpu_custom_call.1} parent=27 // pred_check
          %p337 = pneg %p101
        $region38: #{tpu_custom_call.1} parent=27 // pred_check_branch
          %339 = sbr.rel (%p337) target = $region40
        $region39: #{tpu_custom_call.1} parent=27 // pred_region
          %s340 = smul.u32 2, %s24
          %s341 = smul.u32 2, %s25
          %s343 = ssub.s32 512, 512
          %344 = vsyncadd %s333, %s343
          %s345 = smul.addr %s340, 2
          %s346 = sadd.s32 %s341, %s345
          %s347 = smul.addr %s346, 128
          %s348 = scalar_lea.hbm %s2, %s347
          %s349 = sshll.u32 %s336, 4
          %s350 = int_to_ptr.vmem [resolvable:$true] %s349
          %355 = dma.vmem_to_hbm [thread:$0]  %s350, 512, %s348, %s333, 128, 128, 8
        $region40: #{tpu_custom_call.1} parent=27 // pred_fallthru
          _
      $region28: #{tpu_custom_call.1} parent=5 // pred_fallthru
        _
      %p356 = scmp.le.s32.totalorder 2, %s15
      // Predicated region
      $region41: #{tpu_custom_call.1} parent=5 // pred_check
        %p357 = pneg %p356
      $region42: #{tpu_custom_call.1} parent=5 // pred_check_branch
        %359 = sbr.rel (%p357) target = $region44
      $region43: #{tpu_custom_call.1} parent=5 // pred_region
        %s360 = ssub.s32 %s15, 2
        // Predicated region
        $region45: #{tpu_custom_call.1} parent=43 // pred_check
          %p361 = pneg %p107
        $region46: #{tpu_custom_call.1} parent=43 // pred_check_branch
          %363 = sbr.rel (%p361) target = $region48
        $region47: #{tpu_custom_call.1} parent=43 // pred_region
          %s364 = sand.u32 %s92, 1
          %s365 = scalar_lea.sflag [#allocation4], %s364
          %s366 = sand.u32 %s92, 1
          %s367 = smul.addr %s366, 32
          %s368 = scalar_lea.vmem [#allocation7], %s367
          %369 = dma.done %s365, 512
        $region48: #{tpu_custom_call.1} parent=43 // pred_fallthru
          _
      $region44: #{tpu_custom_call.1} parent=5 // pred_fallthru
        _
    $region6: #{tpu_custom_call.1} parent=1 // loop_footer
      %s19 = sadd.s32 1, %s15
    $region7: #{tpu_custom_call.1} parent=1 // loop_footer_branch
      %14 = sbr.rel target = $region3
    $region8: #{tpu_custom_call.1} parent=1 // loop_exit
      _
    %370 = vsyncpa [#allocation3], 1
    %s371 = scalar_lea.sflag [#allocation3], 1
    %372 = vsyncpa %s371, 1
    %373 = vsyncpa [#allocation6], 1
    %374 = vsyncpa [#allocation4], 1
    %s375 = scalar_lea.sflag [#allocation4], 1
    %376 = vsyncpa %s375, 1

</llo_original>
